<compile_context>
chip_gen: v6e
topology: v6e:2x2x1
jax: 0.10.0
libtpu: 0.0.40
codegen_flags: <defaults>
</compile_context>

<pallas_src>
import jax
import jax.numpy as jnp
from jax.experimental import pallas as pl
from jax.experimental.pallas import tpu as pltpu

# ---- small shapes consistent with the module ----
BATCH = 2          # B
NUM_STEPS = 8      # T  (encoder sequence length of batch_H)
INPUT_SIZE = 32    # D  (channels of batch_H)
HIDDEN = 32        # H
NUM_EMB = 16       # num_embeddings (one-hot size)


def _attention_decode_kernel(h0_ref, c0_ref, bh_ref, oh_ref, wa_ref, wl_ref,
                             out_ref, bhp_ref, h_sc, c_sc):
    """One grid step == one AttentionCell forward; state carried in VMEM scratch."""
    step = pl.program_id(0)
    B, T, D = bh_ref.shape
    H = h0_ref.shape[1]
    E = oh_ref.shape[1]

    @pl.when(step == 0)
    def _init():
        h_sc[...] = h0_ref[...].astype(jnp.float32)
        c_sc[...] = c0_ref[...].astype(jnp.float32)
        # Loop-invariant i2h projection of batch_H: computed once per sequence.
        proj = jnp.dot(bh_ref[...].astype(jnp.float32).reshape(B * T, D),
                       wa_ref[0:D, :], preferred_element_type=jnp.float32)
        bhp_ref[...] = proj.reshape(B, T, H)

    h_prev = h_sc[...]
    c_prev = c_sc[...]
    batch_H = bh_ref[...].astype(jnp.float32)
    onehots = oh_ref[...].astype(jnp.float32)

    # ---- additive attention scores ----
    hproj = (jnp.dot(h_prev, wa_ref[D:D + H, :], preferred_element_type=jnp.float32)
             + wa_ref[D + H:D + H + 1, :])                          # (B, H)
    th = jnp.tanh(bhp_ref[...] + hproj[:, None, :])                 # (B, T, H)
    # score Linear(H, 1, bias=False) as broadcast-mul + lane reduce
    e = jnp.sum(th * wa_ref[D + H + 8:D + H + 9, :], axis=-1)       # (B, T)

    # numerically stable softmax over T (PyTorch dim=1)
    e = e - jnp.max(e, axis=-1, keepdims=True)
    p = jnp.exp(e)
    alpha = p / jnp.sum(p, axis=-1, keepdims=True)                  # (B, T)

    # context: VPU mul + sublane reduce (cheaper than MXU round-trip at T=8)
    context = jnp.sum(alpha[:, :, None] * batch_H, axis=1)          # (B, D)

    # ---- LSTMCell on [context, char_onehots]; no in-kernel lane concat ----
    # gate columns pre-permuted wrapper-side to (i, f, o, g)
    gates = (jnp.dot(context, wl_ref[0:D, :], preferred_element_type=jnp.float32)
             + jnp.dot(onehots, wl_ref[D:D + E, :], preferred_element_type=jnp.float32)
             + jnp.dot(h_prev, wl_ref[D + E:D + E + H, :], preferred_element_type=jnp.float32)
             + wl_ref[D + E + H:D + E + H + 1, :])                  # (B, 4H)
    sig = jax.nn.sigmoid(gates[:, 0:3 * H])                         # one EUP pass over i,f,o
    i_g = sig[:, 0:H]
    f_g = sig[:, H:2 * H]
    o_g = sig[:, 2 * H:3 * H]
    g_g = jnp.tanh(gates[:, 3 * H:4 * H])
    c_new = f_g * c_prev + i_g * g_g
    h_new = o_g * jnp.tanh(c_new)

    h_sc[...] = h_new
    c_sc[...] = c_new

    # single lane-dense (B, 128) per-step output slab: [h | c | context | alpha | pad]
    out_ref[:, 0:H] = h_new.astype(out_ref.dtype)
    out_ref[:, H:2 * H] = c_new.astype(out_ref.dtype)
    out_ref[:, 2 * H:2 * H + D] = context.astype(out_ref.dtype)
    out_ref[:, 2 * H + D:2 * H + D + T] = alpha.astype(out_ref.dtype)
    pad = out_ref.shape[1] - (2 * H + D + T)
    if pad > 0:
        out_ref[:, 2 * H + D + T:] = jnp.zeros((B, pad), out_ref.dtype)


def attention_decode_pallas(prev_hidden, batch_H, char_onehots_seq, packed):
    """Fused teacher-forced decode: one AttentionCell step per grid iteration.

    char_onehots_seq: (T_dec, B, num_embeddings)
    Returns (h_all, c_all, alpha_all, context_all), each with a leading T_dec axis.
    """
    # TODO(synk): greedy data-dependent char feedback (argmax of the parent
    # Attention module's generator) is outside AttentionCell.forward; only
    # teacher-forced / given one-hot sequences are fused into the grid here.
    h0, c0 = prev_hidden
    T_dec, _, E = char_onehots_seq.shape
    B, T, D = batch_H.shape
    H = h0.shape[1]
    wa, wl = packed["attn_slab"], packed["lstm_slab"]
    w_out = ((2 * H + D + T + 127) // 128) * 128

    out = pl.pallas_call(
        _attention_decode_kernel,
        out_shape=jax.ShapeDtypeStruct((T_dec, B, w_out), jnp.float32),
        grid=(T_dec,),
        in_specs=[
            pl.BlockSpec((B, H), lambda t: (0, 0)),           # h0       (resident)
            pl.BlockSpec((B, H), lambda t: (0, 0)),           # c0       (resident)
            pl.BlockSpec((B, T, D), lambda t: (0, 0, 0)),     # batch_H  (resident)
            pl.BlockSpec((None, B, E), lambda t: (t, 0, 0)),  # per-step one-hots
            pl.BlockSpec(wa.shape, lambda t: (0, 0)),         # attention slab (resident)
            pl.BlockSpec(wl.shape, lambda t: (0, 0)),         # LSTM slab      (resident)
        ],
        out_specs=pl.BlockSpec((None, B, w_out), lambda t: (t, 0, 0)),
        scratch_shapes=[
            pltpu.VMEM((B, T, H), jnp.float32),   # cached batch_H_proj
            pltpu.VMEM((B, H), jnp.float32),      # h carry
            pltpu.VMEM((B, H), jnp.float32),      # c carry
        ],
        compiler_params=pltpu.CompilerParams(
            dimension_semantics=("arbitrary",)),
    )(h0, c0, batch_H, char_onehots_seq, wa, wl)

    h_all = out[:, :, 0:H]
    c_all = out[:, :, H:2 * H]
    context_all = out[:, :, 2 * H:2 * H + D]
    alpha_all = out[:, :, 2 * H + D:2 * H + D + T]
    return h_all, c_all, alpha_all, context_all


def attention_cell_pallas(prev_hidden, batch_H, char_onehots, packed, is_domain=False):
    """Single AttentionCell.forward (T_dec == 1). Returns ((h, c), alpha[, context])."""
    h_all, c_all, alpha_all, ctx_all = attention_decode_pallas(
        prev_hidden, batch_H, char_onehots[None], packed)
    cur_hidden = (h_all[0], c_all[0])
    alpha = alpha_all[0][:, :, None]                         # (B, T, 1) like PyTorch
    if is_domain:
        return cur_hidden, alpha, ctx_all[0]
    return cur_hidden, alpha


# ---------------- parameters (PyTorch layout) + wrapper-side packing ----------------
def init_params(key, input_size, hidden_size, num_embeddings):
    ks = jax.random.split(key, 8)
    s = 0.1
    return {
        "w_i2h":   jax.random.normal(ks[0], (hidden_size, input_size), jnp.float32) * s,
        "w_h2h":   jax.random.normal(ks[1], (hidden_size, hidden_size), jnp.float32) * s,
        "b_h2h":   jax.random.normal(ks[2], (hidden_size,), jnp.float32) * s,
        "w_score": jax.random.normal(ks[3], (1, hidden_size), jnp.float32) * s,
        "w_ih":    jax.random.normal(ks[4], (4 * hidden_size, input_size + num_embeddings), jnp.float32) * s,
        "w_hh":    jax.random.normal(ks[5], (4 * hidden_size, hidden_size), jnp.float32) * s,
        "b_ih":    jax.random.normal(ks[6], (4 * hidden_size,), jnp.float32) * s,
        "b_hh":    jax.random.normal(ks[7], (4 * hidden_size,), jnp.float32) * s,
    }


def _reorder_gate_cols(w_t, hidden):
    """PyTorch LSTM column order (i, f, g, o) -> kernel order (i, f, o, g)."""
    return jnp.concatenate(
        [w_t[:, 0:2 * hidden], w_t[:, 3 * hidden:4 * hidden], w_t[:, 2 * hidden:3 * hidden]],
        axis=1)


def pack_params(p):
    """One-time layout plumbing: two sublane-aligned VMEM weight slabs."""
    H = p["w_h2h"].shape[0]
    D = p["w_i2h"].shape[1]
    E = p["w_ih"].shape[1] - D
    assert D % 8 == 0 and H % 8 == 0 and (D + E) % 8 == 0, "sublane alignment"

    # attention slab, width H: rows [w_i2h^T (D) | w_h2h^T (H) | b_h2h (8) | w_score (8)]
    pad7_h = jnp.zeros((7, H), jnp.float32)
    attn_slab = jnp.concatenate([
        jnp.asarray(p["w_i2h"].T),               # rows 0      : D
        jnp.asarray(p["w_h2h"].T),               # rows D      : D+H
        p["b_h2h"][None, :], pad7_h,             # row  D+H
        p["w_score"], pad7_h,                    # row  D+H+8
    ], axis=0)

    # LSTM slab, width 4H, gate columns reordered to (i, f, o, g):
    # rows [w_ih^T context part (D) | w_ih^T onehot part (E) | w_hh^T (H) | b_ih+b_hh (8)]
    pad7_4h = jnp.zeros((7, 4 * H), jnp.float32)
    lstm_slab = jnp.concatenate([
        _reorder_gate_cols(jnp.asarray(p["w_ih"].T), H),             # rows 0     : D+E
        _reorder_gate_cols(jnp.asarray(p["w_hh"].T), H),             # rows D+E   : D+E+H
        _reorder_gate_cols((p["b_ih"] + p["b_hh"])[None, :], H),     # row  D+E+H
        pad7_4h,
    ], axis=0)

    return {"attn_slab": attn_slab, "lstm_slab": lstm_slab}


# ---------------- pure-JAX reference (mirrors the PyTorch forward) ----------------
def attention_cell_ref(prev_hidden, batch_H, char_onehots, p):
    h_prev, c_prev = prev_hidden
    batch_H_proj = batch_H @ p["w_i2h"].T                               # (B, T, H)
    prev_hidden_proj = (h_prev @ p["w_h2h"].T + p["b_h2h"])[:, None, :]
    e = jnp.tanh(batch_H_proj + prev_hidden_proj) @ p["w_score"].T      # (B, T, 1)
    alpha = jax.nn.softmax(e, axis=1)
    context = jnp.einsum("bt,btd->bd", alpha[..., 0], batch_H)
    cat = jnp.concatenate([context, char_onehots], axis=1)
    gates = cat @ p["w_ih"].T + p["b_ih"] + h_prev @ p["w_hh"].T + p["b_hh"]
    i, f, g, o = jnp.split(gates, 4, axis=1)
    i, f, g, o = jax.nn.sigmoid(i), jax.nn.sigmoid(f), jnp.tanh(g), jax.nn.sigmoid(o)
    c_new = f * c_prev + i * g
    h_new = o * jnp.tanh(c_new)
    return (h_new, c_new), alpha, context


if __name__ == "__main__":
    root = jax.random.PRNGKey(0)
    k_par, k_H, k_h, k_c, k_char, k_seq = jax.random.split(root, 6)

    params = init_params(k_par, INPUT_SIZE, HIDDEN, NUM_EMB)
    packed = pack_params(params)

    batch_H = jax.random.normal(k_H, (BATCH, NUM_STEPS, INPUT_SIZE), jnp.float32)
    h0 = jax.random.normal(k_h, (BATCH, HIDDEN), jnp.float32) * 0.5
    c0 = jax.random.normal(k_c, (BATCH, HIDDEN), jnp.float32) * 0.5

    # ---- 1) single-step AttentionCell.forward (is_domain=True superset return) ----
    labels = jax.random.randint(k_char, (BATCH,), 0, NUM_EMB)
    char_onehots = jax.nn.one_hot(labels, NUM_EMB, dtype=jnp.float32)

    (h1, c1), alpha, context = attention_cell_pallas(
        (h0, c0), batch_H, char_onehots, packed, is_domain=True)
    jax.block_until_ready((h1, c1, alpha, context))

    (h_r, c_r), alpha_r, ctx_r = attention_cell_ref((h0, c0), batch_H, char_onehots, params)
    assert h1.shape == (BATCH, HIDDEN) and c1.shape == (BATCH, HIDDEN)
    assert alpha.shape == (BATCH, NUM_STEPS, 1)
    assert jnp.allclose(h1, h_r, atol=1e-4, rtol=1e-4), "h mismatch"
    assert jnp.allclose(c1, c_r, atol=1e-4, rtol=1e-4), "c mismatch"
    assert jnp.allclose(alpha, alpha_r, atol=1e-4, rtol=1e-4), "alpha mismatch"
    assert jnp.allclose(context, ctx_r, atol=1e-4, rtol=1e-4), "context mismatch"

    # ---- 2) fused multi-step (teacher-forced) decode: one pallas_call, grid over steps ----
    DEC_STEPS = 6
    labels_seq = jax.random.randint(k_seq, (DEC_STEPS, BATCH), 0, NUM_EMB)
    onehots_seq = jax.nn.one_hot(labels_seq, NUM_EMB, dtype=jnp.float32)   # (T_dec, B, E)

    h_all, c_all, alpha_all, ctx_all = attention_decode_pallas(
        (h0, c0), batch_H, onehots_seq, packed)
    jax.block_until_ready((h_all, c_all, alpha_all, ctx_all))

    h_r, c_r = h0, c0
    for t in range(DEC_STEPS):
        (h_r, c_r), a_r, cx_r = attention_cell_ref((h_r, c_r), batch_H, onehots_seq[t], params)
        assert jnp.allclose(h_all[t], h_r, atol=2e-4, rtol=2e-4), f"h mismatch at step {t}"
        assert jnp.allclose(c_all[t], c_r, atol=2e-4, rtol=2e-4), f"c mismatch at step {t}"
        assert jnp.allclose(alpha_all[t], a_r[..., 0], atol=2e-4, rtol=2e-4), f"alpha mismatch at step {t}"
        assert jnp.allclose(ctx_all[t], cx_r, atol=2e-4, rtol=2e-4), f"context mismatch at step {t}"

    print("KERNEL_OK")
</pallas_src>

<mosaic_0001>
module attributes {stable_mosaic.version = 11 : i64} {
  func.func @_attention_decode_kernel(%arg0: i32, %arg1: memref<2x32xf32, #tpu.memory_space<vmem>>, %arg2: memref<2x32xf32, #tpu.memory_space<vmem>>, %arg3: memref<2x8x32xf32, #tpu.memory_space<vmem>>, %arg4: memref<1x2x16xf32, #tpu.memory_space<vmem>>, %arg5: memref<80x32xf32, #tpu.memory_space<vmem>>, %arg6: memref<88x128xf32, #tpu.memory_space<vmem>>, %arg7: memref<1x2x128xf32, #tpu.memory_space<vmem>>, %arg8: memref<2x8x32xf32, #tpu.memory_space<vmem>>, %arg9: memref<2x32xf32, #tpu.memory_space<vmem>>, %arg10: memref<2x32xf32, #tpu.memory_space<vmem>>) attributes {dimension_semantics = [#tpu.dimension_semantics<arbitrary>], iteration_bounds = array<i64: 1>, scalar_prefetch = 0 : i64, scratch_operands = 3 : i64, tpu.core_type = #tpu.core_type<tc>, window_params = [{pipeline_mode = #tpu.pipeline_mode<synchronous>, transform_indices = @transform_0, window_bounds = array<i64: 2, 32>}, {pipeline_mode = #tpu.pipeline_mode<synchronous>, transform_indices = @transform_1, window_bounds = array<i64: 2, 32>}, {pipeline_mode = #tpu.pipeline_mode<synchronous>, transform_indices = @transform_2, window_bounds = array<i64: 2, 8, 32>}, {transform_indices = @transform_3, window_bounds = array<i64: 1, 2, 16>}, {pipeline_mode = #tpu.pipeline_mode<synchronous>, transform_indices = @transform_4, window_bounds = array<i64: 80, 32>}, {pipeline_mode = #tpu.pipeline_mode<synchronous>, transform_indices = @transform_5, window_bounds = array<i64: 88, 128>}, {transform_indices = @transform_6, window_bounds = array<i64: 1, 2, 128>}]} {
    %c0_i32 = arith.constant 0 : i32
    %0 = arith.cmpi eq, %arg0, %c0_i32 : i32
    %1 = arith.extui %0 : i1 to i32
    %c0_i32_0 = arith.constant 0 : i32
    %2 = arith.cmpi ne, %1, %c0_i32_0 : i32
    scf.if %2 {
      %c0_48 = arith.constant 0 : index
      %c0_49 = arith.constant 0 : index
      %81 = vector.load %arg1[%c0_48, %c0_49] : memref<2x32xf32, #tpu.memory_space<vmem>>, vector<2x32xf32>
      %c0_50 = arith.constant 0 : index
      %c0_51 = arith.constant 0 : index
      %82 = vector.load %arg9[%c0_50, %c0_51] : memref<2x32xf32, #tpu.memory_space<vmem>>, vector<2x32xf32>
      tpu.vector_store %arg9[%c0_50, %c0_51], %81 {strides = array<i32>} : memref<2x32xf32, #tpu.memory_space<vmem>>, vector<2x32xf32>,
      %c0_52 = arith.constant 0 : index
      %c0_53 = arith.constant 0 : index
      %83 = vector.load %arg2[%c0_52, %c0_53] : memref<2x32xf32, #tpu.memory_space<vmem>>, vector<2x32xf32>
      %c0_54 = arith.constant 0 : index
      %c0_55 = arith.constant 0 : index
      %84 = vector.load %arg10[%c0_54, %c0_55] : memref<2x32xf32, #tpu.memory_space<vmem>>, vector<2x32xf32>
      tpu.vector_store %arg10[%c0_54, %c0_55], %83 {strides = array<i32>} : memref<2x32xf32, #tpu.memory_space<vmem>>, vector<2x32xf32>,
      %c0_56 = arith.constant 0 : index
      %c0_57 = arith.constant 0 : index
      %c0_58 = arith.constant 0 : index
      %85 = vector.load %arg3[%c0_56, %c0_57, %c0_58] : memref<2x8x32xf32, #tpu.memory_space<vmem>>, vector<2x8x32xf32>
      %86 = vector.shape_cast %85 : vector<2x8x32xf32> to vector<16x32xf32>
      %c0_59 = arith.constant 0 : index
      %c0_60 = arith.constant 0 : index
      %87 = vector.load %arg5[%c0_59, %c0_60] : memref<80x32xf32, #tpu.memory_space<vmem>>, vector<32x32xf32>
      %cst_61 = arith.constant dense<0.000000e+00> : vector<16x32xf32>
      %88 = tpu.matmul %86, %87, %cst_61 {dimension_numbers = #tpu.dot_dimension_numbers<[1], [0], [0], [1], [0, 0, 1, 1], [], []>} : vector<16x32xf32>, vector<32x32xf32>, vector<16x32xf32> -> vector<16x32xf32>
      %89 = vector.shape_cast %88 : vector<16x32xf32> to vector<2x8x32xf32>
      %c0_62 = arith.constant 0 : index
      %c0_63 = arith.constant 0 : index
      %c0_64 = arith.constant 0 : index
      %90 = vector.load %arg8[%c0_62, %c0_63, %c0_64] : memref<2x8x32xf32, #tpu.memory_space<vmem>>, vector<2x8x32xf32>
      tpu.vector_store %arg8[%c0_62, %c0_63, %c0_64], %89 {strides = array<i32>} : memref<2x8x32xf32, #tpu.memory_space<vmem>>, vector<2x8x32xf32>,
    } else {
    }
    %c0 = arith.constant 0 : index
    %c0_1 = arith.constant 0 : index
    %3 = vector.load %arg9[%c0, %c0_1] : memref<2x32xf32, #tpu.memory_space<vmem>>, vector<2x32xf32>
    %c0_2 = arith.constant 0 : index
    %c0_3 = arith.constant 0 : index
    %4 = vector.load %arg10[%c0_2, %c0_3] : memref<2x32xf32, #tpu.memory_space<vmem>>, vector<2x32xf32>
    %c0_4 = arith.constant 0 : index
    %c0_5 = arith.constant 0 : index
    %c0_6 = arith.constant 0 : index
    %5 = vector.load %arg3[%c0_4, %c0_5, %c0_6] : memref<2x8x32xf32, #tpu.memory_space<vmem>>, vector<2x8x32xf32>
    %c0_7 = arith.constant 0 : index
    %c0_8 = arith.constant 0 : index
    %c0_9 = arith.constant 0 : index
    %6 = vector.load %arg4[%c0_7, %c0_8, %c0_9] : memref<1x2x16xf32, #tpu.memory_space<vmem>>, vector<1x2x16xf32>
    %7 = vector.shape_cast %6 : vector<1x2x16xf32> to vector<2x16xf32>
    %c32 = arith.constant 32 : index
    %c0_10 = arith.constant 0 : index
    %8 = vector.load %arg5[%c32, %c0_10] : memref<80x32xf32, #tpu.memory_space<vmem>>, vector<32x32xf32>
    %cst = arith.constant dense<0.000000e+00> : vector<2x32xf32>
    %9 = tpu.matmul %3, %8, %cst {dimension_numbers = #tpu.dot_dimension_numbers<[1], [0], [0], [1], [0, 0, 1, 1], [], []>} : vector<2x32xf32>, vector<32x32xf32>, vector<2x32xf32> -> vector<2x32xf32>
    %c64 = arith.constant 64 : index
    %c0_11 = arith.constant 0 : index
    %10 = vector.load %arg5[%c64, %c0_11] : memref<80x32xf32, #tpu.memory_space<vmem>>, vector<1x32xf32>
    %11 = vector.broadcast %10 : vector<1x32xf32> to vector<2x32xf32>
    %12 = arith.addf %9, %11 : vector<2x32xf32>
    %c0_12 = arith.constant 0 : index
    %c0_13 = arith.constant 0 : index
    %c0_14 = arith.constant 0 : index
    %13 = vector.load %arg8[%c0_12, %c0_13, %c0_14] : memref<2x8x32xf32, #tpu.memory_space<vmem>>, vector<2x8x32xf32>
    %14 = vector.shape_cast %12 : vector<2x32xf32> to vector<2x1x32xf32>
    %15 = vector.broadcast %14 : vector<2x1x32xf32> to vector<2x8x32xf32>
    %16 = arith.addf %13, %15 : vector<2x8x32xf32>
    %17 = math.tanh %16 : vector<2x8x32xf32>
    %c72 = arith.constant 72 : index
    %c0_15 = arith.constant 0 : index
    %18 = vector.load %arg5[%c72, %c0_15] : memref<80x32xf32, #tpu.memory_space<vmem>>, vector<1x32xf32>
    %19 = vector.shape_cast %18 : vector<1x32xf32> to vector<1x1x32xf32>
    %20 = vector.broadcast %19 : vector<1x1x32xf32> to vector<2x8x32xf32>
    %21 = arith.mulf %17, %20 : vector<2x8x32xf32>
    %cst_16 = arith.constant dense<0.000000e+00> : vector<2x8xf32>
    %22 = vector.multi_reduction <add>, %21, %cst_16 [2] : vector<2x8x32xf32> to vector<2x8xf32>
    %cst_17 = arith.constant dense<0xFF800000> : vector<2xf32>
    %23 = vector.multi_reduction <maximumf>, %22, %cst_17 [1] : vector<2x8xf32> to vector<2xf32>
    %24 = vector.shape_cast %23 : vector<2xf32> to vector<2x1xf32>
    %25 = vector.broadcast %24 : vector<2x1xf32> to vector<2x8xf32>
    %26 = arith.subf %22, %25 : vector<2x8xf32>
    %27 = math.exp %26 : vector<2x8xf32>
    %cst_18 = arith.constant dense<0.000000e+00> : vector<2xf32>
    %28 = vector.multi_reduction <add>, %27, %cst_18 [1] : vector<2x8xf32> to vector<2xf32>
    %29 = vector.shape_cast %28 : vector<2xf32> to vector<2x1xf32>
    %30 = vector.broadcast %29 : vector<2x1xf32> to vector<2x8xf32>
    %31 = arith.divf %27, %30 : vector<2x8xf32>
    %32 = vector.shape_cast %31 : vector<2x8xf32> to vector<2x8x1xf32>
    %33 = vector.broadcast %32 : vector<2x8x1xf32> to vector<2x8x32xf32>
    %34 = arith.mulf %33, %5 : vector<2x8x32xf32>
    %cst_19 = arith.constant dense<0.000000e+00> : vector<2x32xf32>
    %35 = vector.multi_reduction <add>, %34, %cst_19 [1] : vector<2x8x32xf32> to vector<2x32xf32>
    %c0_20 = arith.constant 0 : index
    %c0_21 = arith.constant 0 : index
    %36 = vector.load %arg6[%c0_20, %c0_21] : memref<88x128xf32, #tpu.memory_space<vmem>>, vector<32x128xf32>
    %cst_22 = arith.constant dense<0.000000e+00> : vector<2x128xf32>
    %37 = tpu.matmul %35, %36, %cst_22 {dimension_numbers = #tpu.dot_dimension_numbers<[1], [0], [0], [1], [0, 0, 1, 1], [], []>} : vector<2x32xf32>, vector<32x128xf32>, vector<2x128xf32> -> vector<2x128xf32>
    %c32_23 = arith.constant 32 : index
    %c0_24 = arith.constant 0 : index
    %38 = vector.load %arg6[%c32_23, %c0_24] : memref<88x128xf32, #tpu.memory_space<vmem>>, vector<16x128xf32>
    %cst_25 = arith.constant dense<0.000000e+00> : vector<2x128xf32>
    %39 = tpu.matmul %7, %38, %cst_25 {dimension_numbers = #tpu.dot_dimension_numbers<[1], [0], [0], [1], [0, 0, 1, 1], [], []>} : vector<2x16xf32>, vector<16x128xf32>, vector<2x128xf32> -> vector<2x128xf32>
    %40 = arith.addf %37, %39 : vector<2x128xf32>
    %c48 = arith.constant 48 : index
    %c0_26 = arith.constant 0 : index
    %41 = vector.load %arg6[%c48, %c0_26] : memref<88x128xf32, #tpu.memory_space<vmem>>, vector<32x128xf32>
    %cst_27 = arith.constant dense<0.000000e+00> : vector<2x128xf32>
    %42 = tpu.matmul %3, %41, %cst_27 {dimension_numbers = #tpu.dot_dimension_numbers<[1], [0], [0], [1], [0, 0, 1, 1], [], []>} : vector<2x32xf32>, vector<32x128xf32>, vector<2x128xf32> -> vector<2x128xf32>
    %43 = arith.addf %40, %42 : vector<2x128xf32>
    %c80 = arith.constant 80 : index
    %c0_28 = arith.constant 0 : index
    %44 = vector.load %arg6[%c80, %c0_28] : memref<88x128xf32, #tpu.memory_space<vmem>>, vector<1x128xf32>
    %45 = vector.broadcast %44 : vector<1x128xf32> to vector<2x128xf32>
    %46 = arith.addf %43, %45 : vector<2x128xf32>
    %47 = vector.extract_strided_slice %46 {offsets = [0, 0], sizes = [2, 96], strides = [1, 1]} : vector<2x128xf32> to vector<2x96xf32>
    %48 = arith.negf %47 : vector<2x96xf32>
    %49 = math.exp %48 : vector<2x96xf32>
    %cst_29 = arith.constant 1.000000e+00 : f32
    %50 = vector.broadcast %cst_29 : f32 to vector<2x96xf32>
    %51 = arith.addf %50, %49 : vector<2x96xf32>
    %52 = arith.divf %50, %51 : vector<2x96xf32>
    %53 = vector.extract_strided_slice %52 {offsets = [0, 0], sizes = [2, 32], strides = [1, 1]} : vector<2x96xf32> to vector<2x32xf32>
    %54 = vector.extract_strided_slice %52 {offsets = [0, 32], sizes = [2, 32], strides = [1, 1]} : vector<2x96xf32> to vector<2x32xf32>
    %55 = vector.extract_strided_slice %52 {offsets = [0, 64], sizes = [2, 32], strides = [1, 1]} : vector<2x96xf32> to vector<2x32xf32>
    %56 = vector.extract_strided_slice %46 {offsets = [0, 96], sizes = [2, 32], strides = [1, 1]} : vector<2x128xf32> to vector<2x32xf32>
    %57 = math.tanh %56 : vector<2x32xf32>
    %58 = arith.mulf %54, %4 : vector<2x32xf32>
    %59 = arith.mulf %53, %57 : vector<2x32xf32>
    %60 = arith.addf %58, %59 : vector<2x32xf32>
    %61 = math.tanh %60 : vector<2x32xf32>
    %62 = arith.mulf %55, %61 : vector<2x32xf32>
    %c0_30 = arith.constant 0 : index
    %c0_31 = arith.constant 0 : index
    %63 = vector.load %arg9[%c0_30, %c0_31] : memref<2x32xf32, #tpu.memory_space<vmem>>, vector<2x32xf32>
    tpu.vector_store %arg9[%c0_30, %c0_31], %62 {strides = array<i32>} : memref<2x32xf32, #tpu.memory_space<vmem>>, vector<2x32xf32>,
    %c0_32 = arith.constant 0 : index
    %c0_33 = arith.constant 0 : index
    %64 = vector.load %arg10[%c0_32, %c0_33] : memref<2x32xf32, #tpu.memory_space<vmem>>, vector<2x32xf32>
    tpu.vector_store %arg10[%c0_32, %c0_33], %60 {strides = array<i32>} : memref<2x32xf32, #tpu.memory_space<vmem>>, vector<2x32xf32>,
    %c0_34 = arith.constant 0 : index
    %c0_35 = arith.constant 0 : index
    %c0_36 = arith.constant 0 : index
    %65 = vector.load %arg7[%c0_34, %c0_35, %c0_36] : memref<1x2x128xf32, #tpu.memory_space<vmem>>, vector<1x2x32xf32>
    %66 = vector.shape_cast %65 : vector<1x2x32xf32> to vector<2x32xf32>
    %67 = vector.shape_cast %62 : vector<2x32xf32> to vector<1x2x32xf32>
    tpu.vector_store %arg7[%c0_34, %c0_35, %c0_36], %67 {strides = array<i32>} : memref<1x2x128xf32, #tpu.memory_space<vmem>>, vector<1x2x32xf32>,
    %c0_37 = arith.constant 0 : index
    %c0_38 = arith.constant 0 : index
    %c32_39 = arith.constant 32 : index
    %68 = vector.load %arg7[%c0_37, %c0_38, %c32_39] : memref<1x2x128xf32, #tpu.memory_space<vmem>>, vector<1x2x32xf32>
    %69 = vector.shape_cast %68 : vector<1x2x32xf32> to vector<2x32xf32>
    %70 = vector.shape_cast %60 : vector<2x32xf32> to vector<1x2x32xf32>
    tpu.vector_store %arg7[%c0_37, %c0_38, %c32_39], %70 {strides = array<i32>} : memref<1x2x128xf32, #tpu.memory_space<vmem>>, vector<1x2x32xf32>,
    %c0_40 = arith.constant 0 : index
    %c0_41 = arith.constant 0 : index
    %c64_42 = arith.constant 64 : index
    %71 = vector.load %arg7[%c0_40, %c0_41, %c64_42] : memref<1x2x128xf32, #tpu.memory_space<vmem>>, vector<1x2x32xf32>
    %72 = vector.shape_cast %71 : vector<1x2x32xf32> to vector<2x32xf32>
    %73 = vector.shape_cast %35 : vector<2x32xf32> to vector<1x2x32xf32>
    tpu.vector_store %arg7[%c0_40, %c0_41, %c64_42], %73 {strides = array<i32>} : memref<1x2x128xf32, #tpu.memory_space<vmem>>, vector<1x2x32xf32>,
    %c0_43 = arith.constant 0 : index
    %c0_44 = arith.constant 0 : index
    %c96 = arith.constant 96 : index
    %74 = vector.load %arg7[%c0_43, %c0_44, %c96] : memref<1x2x128xf32, #tpu.memory_space<vmem>>, vector<1x2x8xf32>
    %75 = vector.shape_cast %74 : vector<1x2x8xf32> to vector<2x8xf32>
    %76 = vector.shape_cast %31 : vector<2x8xf32> to vector<1x2x8xf32>
    tpu.vector_store %arg7[%c0_43, %c0_44, %c96], %76 {strides = array<i32>} : memref<1x2x128xf32, #tpu.memory_space<vmem>>, vector<1x2x8xf32>,
    %cst_45 = arith.constant 0.000000e+00 : f32
    %77 = vector.broadcast %cst_45 : f32 to vector<2x24xf32>
    %c0_46 = arith.constant 0 : index
    %c0_47 = arith.constant 0 : index
    %c104 = arith.constant 104 : index
    %78 = vector.load %arg7[%c0_46, %c0_47, %c104] : memref<1x2x128xf32, #tpu.memory_space<vmem>>, vector<1x2x24xf32>
    %79 = vector.shape_cast %78 : vector<1x2x24xf32> to vector<2x24xf32>
    %80 = vector.shape_cast %77 : vector<2x24xf32> to vector<1x2x24xf32>
    tpu.vector_store %arg7[%c0_46, %c0_47, %c104], %80 {strides = array<i32>} : memref<1x2x128xf32, #tpu.memory_space<vmem>>, vector<1x2x24xf32>,
    return
  }
  func.func @transform_0(%arg0: i32) -> (i32, i32) {
    %c0_i32 = arith.constant 0 : i32
    %c0_i32_0 = arith.constant 0 : i32
    %c0_i32_1 = arith.constant 0 : i32
    return %c0_i32, %c0_i32_0 : i32, i32
  }
  func.func @transform_1(%arg0: i32) -> (i32, i32) {
    %c0_i32 = arith.constant 0 : i32
    %c0_i32_0 = arith.constant 0 : i32
    %c0_i32_1 = arith.constant 0 : i32
    return %c0_i32, %c0_i32_0 : i32, i32
  }
  func.func @transform_2(%arg0: i32) -> (i32, i32, i32) {
    %c0_i32 = arith.constant 0 : i32
    %c0_i32_0 = arith.constant 0 : i32
    %c0_i32_1 = arith.constant 0 : i32
    %c0_i32_2 = arith.constant 0 : i32
    return %c0_i32, %c0_i32_0, %c0_i32_1 : i32, i32, i32
  }
  func.func @transform_3(%arg0: i32) -> (i32, i32, i32) {
    %c0_i32 = arith.constant 0 : i32
    %c0_i32_0 = arith.constant 0 : i32
    %c0_i32_1 = arith.constant 0 : i32
    return %arg0, %c0_i32, %c0_i32_0 : i32, i32, i32
  }
  func.func @transform_4(%arg0: i32) -> (i32, i32) {
    %c0_i32 = arith.constant 0 : i32
    %c0_i32_0 = arith.constant 0 : i32
    %c0_i32_1 = arith.constant 0 : i32
    return %c0_i32, %c0_i32_0 : i32, i32
  }
  func.func @transform_5(%arg0: i32) -> (i32, i32) {
    %c0_i32 = arith.constant 0 : i32
    %c0_i32_0 = arith.constant 0 : i32
    %c0_i32_1 = arith.constant 0 : i32
    return %c0_i32, %c0_i32_0 : i32, i32
  }
  func.func @transform_6(%arg0: i32) -> (i32, i32, i32) {
    %c0_i32 = arith.constant 0 : i32
    %c0_i32_0 = arith.constant 0 : i32
    %c0_i32_1 = arith.constant 0 : i32
    return %arg0, %c0_i32, %c0_i32_0 : i32, i32, i32
  }
}

</mosaic_0001>

<llo_original>
// kernel: tpu_custom_call.1
$region0: #{tpu_custom_call.1}
  #allocation0 [shape = 'u32[]', space=smem, size = 0x4, offset = 0x4, fixed_abs, tag = 'smem constant byte address 0x4 - core index']
  #allocation1 [shape = 'u32[144,128]{1,0:T(1,128)}', space=vmem, size = 0x12000, scoped, tag = 'internal scratch']
  #allocation2 [shape = 'f32[2,8,32]{2,1,0:T(8,128)}', space=vmem, size = 0x2000, scoped, tag = 'scratch operand']
  #allocation3 [shape = 'f32[2,32]{1,0:T(2,128)}', space=vmem, size = 0x400, scoped, tag = 'scratch operand']
  #allocation4 [shape = 'f32[2,32]{1,0:T(2,128)}', space=vmem, size = 0x400, scoped, tag = 'scratch operand']
  %s0 = inlined_call_operand.vmem [shape: f32[2,32], index: 0, kind: input, shape index: {}]
  %s1 = inlined_call_operand.vmem [shape: f32[2,32], index: 1, kind: input, shape index: {}]
  %s2 = inlined_call_operand.vmem [shape: f32[2,8,32], index: 2, kind: input, shape index: {}]
  %s3 = inlined_call_operand.vmem [shape: f32[1,2,16], index: 3, kind: input, shape index: {}]
  %s4 = inlined_call_operand.vmem [shape: f32[80,32], index: 4, kind: input, shape index: {}]
  %s5 = inlined_call_operand.vmem [shape: f32[88,128], index: 5, kind: input, shape index: {}]
  %s6 = inlined_call_operand.hbm [shape: f32[1,2,128], index: 6, kind: output, shape index: {}]
  %s7 = sld [smem:[#allocation0]]
  $region38: #{tpu_custom_call.1} parent=0
    _
  %s9 = ssub.s32 1, %s7
  %s10 = scalar_select 0, %s9, %s7
  $region1: #{tpu_custom_call.1} parent=0
    #allocation5 [shape = 'u8[1024]{0}', space=vmem, size = 0x400, scoped, tag = 'output window, operand 0, single buffered']
    #allocation6 [shape = 's32[1]{0}', space=sflag, size = 0x4, scoped, tag = 'scoped memory for tpu_custom_call.1']
    %11 = vsyncpa [#allocation6], 0
    // Predicated region
    $region2: #{tpu_custom_call.1} parent=1 // pred_check
      _
    $region3: #{tpu_custom_call.1} parent=1 // pred_check_branch
      %13 = sbr.rel (0) target = $region5
    $region4: #{tpu_custom_call.1} parent=1 // pred_region
      _
    $region5: #{tpu_custom_call.1} parent=1 // pred_fallthru
      _
    // Predicated region
    $region6: #{tpu_custom_call.1} parent=1 // pred_check
      _
    $region7: #{tpu_custom_call.1} parent=1 // pred_check_branch
      %15 = sbr.rel (0) target = $region9
    $region8: #{tpu_custom_call.1} parent=1 // pred_region
      _
    $region9: #{tpu_custom_call.1} parent=1 // pred_fallthru
      _
    // Predicated region
    $region10: #{tpu_custom_call.1} parent=1 // pred_check
      _
    $region11: #{tpu_custom_call.1} parent=1 // pred_check_branch
      %17 = sbr.rel (0) target = $region13
    $region12: #{tpu_custom_call.1} parent=1 // pred_region
      _
    $region13: #{tpu_custom_call.1} parent=1 // pred_fallthru
      _
    // Predicated region
    $region14: #{tpu_custom_call.1} parent=1 // pred_check
      _
    $region15: #{tpu_custom_call.1} parent=1 // pred_check_branch
      %19 = sbr.rel (0) target = $region17
    $region16: #{tpu_custom_call.1} parent=1 // pred_region
      _
    $region17: #{tpu_custom_call.1} parent=1 // pred_fallthru
      _
    // Predicated region
    $region18: #{tpu_custom_call.1} parent=1 // pred_check
      _
    $region19: #{tpu_custom_call.1} parent=1 // pred_check_branch
      %21 = sbr.rel (0) target = $region21
    $region20: #{tpu_custom_call.1} parent=1 // pred_region
      _
    $region21: #{tpu_custom_call.1} parent=1 // pred_fallthru
      _
    // Predicated region
    $region22: #{tpu_custom_call.1} parent=1 // pred_check
      _
    $region23: #{tpu_custom_call.1} parent=1 // pred_check_branch
      %23 = sbr.rel (0) target = $region25
    $region24: #{tpu_custom_call.1} parent=1 // pred_region
      _
    $region25: #{tpu_custom_call.1} parent=1 // pred_fallthru
      _
    %p24 = scmp.eq.s32.totalorder 0, 0
    // Predicated region
    $region26: #{tpu_custom_call.1} parent=1 // pred_check
      %p25 = pneg %p24
    $region27: #{tpu_custom_call.1} parent=1 // pred_check_branch
      %27 = sbr.rel (%p25) target = $region29
    $region28: #{tpu_custom_call.1} parent=1 // pred_region
      %v28 = vld [vmem:[%s0] sm:$0x3]
      %vm29 = vcmask 254976
      %30 = vst.msk [vmem:[#allocation3] sm:$0x3] %vm29, %v28
      %v31 = vld [vmem:[%s1] sm:$0x3]
      %32 = vst.msk [vmem:[#allocation4] sm:$0x3] %vm29, %v31
      %v33 = vld [vmem:[%s2] sm:$0xff]
      %v34 = vld [vmem:[%s2 + $0x8] sm:$0xff]
      %v35 = vld [vmem:[%s4] sm:$0xff]
      %v36 = vld [vmem:[%s4 + $0x8] sm:$0xff]
      %v37 = vld [vmem:[%s4 + $0x10] sm:$0xff]
      %v38 = vld [vmem:[%s4 + $0x18] sm:$0xff]
      %vm39 = vcmask 261120
      %v41 = vsel %vm39, %v33, 0
      %v44 = vsel %vm39, %v34, 0
      %46 = vmatprep.subr.mxu0 0.0
      %47 = vmatpush1.msra.mxu0 0.0
      %48 = vmatprep.subr.mxu0 0.0
      %49 = vmatpush1.msra.mxu0 0.0
      %50 = vmatprep.subr.mxu0 0.0
      %51 = vmatpush1.msra.mxu0 0.0
      %52 = vmatprep.subr.mxu0 0.0
      %53 = vmatpush1.msra.mxu0 0.0
      %54 = vmatprep.subr.mxu0 0.0
      %55 = vmatpush1.msra.mxu0 0.0
      %56 = vmatprep.subr.mxu0 0.0
      %57 = vmatpush1.msra.mxu0 0.0
      %58 = vmatprep.subr.mxu0 0.0
      %59 = vmatpush1.msra.mxu0 0.0
      %60 = vmatprep.subr.mxu0 0.0
      %61 = vmatpush1.msra.mxu0 0.0
      %62 = vmatprep.subr.mxu0 0.0
      %63 = vmatpush1.msra.mxu0 0.0
      %64 = vmatprep.subr.mxu0 0.0
      %65 = vmatpush1.msra.mxu0 0.0
      %66 = vmatprep.subr.mxu0 0.0
      %67 = vmatpush1.msra.mxu0 0.0
      %68 = vmatprep.subr.mxu0 0.0
      %69 = vmatpush1.msra.mxu0 0.0
      %70 = vmatprep.subr.mxu0 0.0
      %71 = vmatpush1.msra.mxu0 %v38
      %72 = vmatprep.subr.mxu0 0.0
      %73 = vmatpush1.msra.mxu0 %v37
      %74 = vmatprep.subr.mxu0 0.0
      %75 = vmatpush1.msra.mxu0 %v36
      %76 = vmatprep.subr.mxu0 0.0
      %77 = vmatpush1.msra.mxu0 %v35
      %78 = vmatprep.subr.mxu0 0.0
      %79 = vmatpush2.msra.mxu0 0.0
      %80 = vmatprep.subr.mxu0 0.0
      %81 = vmatpush2.msra.mxu0 0.0
      %82 = vmatprep.subr.mxu0 0.0
      %83 = vmatpush2.msra.mxu0 0.0
      %84 = vmatprep.subr.mxu0 0.0
      %85 = vmatpush2.msra.mxu0 0.0
      %86 = vmatprep.subr.mxu0 0.0
      %87 = vmatpush2.msra.mxu0 0.0
      %88 = vmatprep.subr.mxu0 0.0
      %89 = vmatpush2.msra.mxu0 0.0
      %90 = vmatprep.subr.mxu0 0.0
      %91 = vmatpush2.msra.mxu0 0.0
      %92 = vmatprep.subr.mxu0 0.0
      %93 = vmatpush2.msra.mxu0 0.0
      %94 = vmatprep.subr.mxu0 0.0
      %95 = vmatpush2.msra.mxu0 0.0
      %96 = vmatprep.subr.mxu0 0.0
      %97 = vmatpush2.msra.mxu0 0.0
      %98 = vmatprep.subr.mxu0 0.0
      %99 = vmatpush2.msra.mxu0 0.0
      %100 = vmatprep.subr.mxu0 0.0
      %101 = vmatpush2.msra.mxu0 0.0
      %102 = vmatprep.subr.mxu0 0.0
      %103 = vmatpush2.msra.mxu0 0.0
      %104 = vmatprep.subr.mxu0 0.0
      %105 = vmatpush2.msra.mxu0 0.0
      %106 = vmatprep.subr.mxu0 0.0
      %107 = vmatpush2.msra.mxu0 0.0
      %108 = vmatprep.subr.mxu0 0.0
      %109 = vmatpush2.msra.mxu0 0.0
      %110 = vmatprep.mubr.f32.mxu0 0.0
      %111 = vmatmul.mubr.f32.gmra.mxu0 %v41
      %v112 = vpop.f32.mrf.mxu0
      %v113 = vadd.f32 0.0, %v112
      %v114 = vpop.f32.mrf.mxu0
      %115 = vmatprep.mubr.f32.mxu0 0.0
      %116 = vmatmul.mubr.f32.gmra.mxu0 %v44
      %v117 = vpop.f32.mrf.mxu0
      %v118 = vadd.f32 0.0, %v117
      %v119 = vpop.f32.mrf.mxu0
      %120 = vdwg.mxu0
      %121 = vst.msk [vmem:[#allocation2] sm:$0xff] %vm39, %v113
      %122 = vst.msk [vmem:[#allocation2 + $0x8] sm:$0xff] %vm39, %v118
    $region29: #{tpu_custom_call.1} parent=1 // pred_fallthru
      _
    %v123 = vld [vmem:[#allocation3] sm:$0x3]
    %v124 = vld [vmem:[#allocation4] sm:$0x3]
    %v125 = vld [vmem:[%s2] sm:$0xff]
    %v126 = vld [vmem:[%s2 + $0x8] sm:$0xff]
    %v127 = vld [vmem:[%s3] sm:$0x3]
    %v128 = vld [vmem:[%s4 + $0x20] sm:$0xff]
    %v129 = vld [vmem:[%s4 + $0x28] sm:$0xff]
    %v130 = vld [vmem:[%s4 + $0x30] sm:$0xff]
    %v131 = vld [vmem:[%s4 + $0x38] sm:$0xff]
    %v132 = vld [vmem:[%s4 + $0x40] sm:$0x1]
    %v133 = vlaneseq
    %v134 = vshrl.u32 %v133, 7
    %v135 = vsub.s32 0, %v134
    %v136 = vrot.slane %v132, %v135
    %vm137 = vcmask 261120
    %v139 = vsel %vm137, %v123, 0
    %141 = vmatprep.subr.mxu0 0.0
    %142 = vmatpush1.msra.mxu0 0.0
    %143 = vmatprep.subr.mxu0 0.0
    %144 = vmatpush1.msra.mxu0 0.0
    %145 = vmatprep.subr.mxu0 0.0
    %146 = vmatpush1.msra.mxu0 0.0
    %147 = vmatprep.subr.mxu0 0.0
    %148 = vmatpush1.msra.mxu0 0.0
    %149 = vmatprep.subr.mxu0 0.0
    %150 = vmatpush1.msra.mxu0 0.0
    %151 = vmatprep.subr.mxu0 0.0
    %152 = vmatpush1.msra.mxu0 0.0
    %153 = vmatprep.subr.mxu0 0.0
    %154 = vmatpush1.msra.mxu0 0.0
    %155 = vmatprep.subr.mxu0 0.0
    %156 = vmatpush1.msra.mxu0 0.0
    %157 = vmatprep.subr.mxu0 0.0
    %158 = vmatpush1.msra.mxu0 0.0
    %159 = vmatprep.subr.mxu0 0.0
    %160 = vmatpush1.msra.mxu0 0.0
    %161 = vmatprep.subr.mxu0 0.0
    %162 = vmatpush1.msra.mxu0 0.0
    %163 = vmatprep.subr.mxu0 0.0
    %164 = vmatpush1.msra.mxu0 0.0
    %165 = vmatprep.subr.mxu0 0.0
    %166 = vmatpush1.msra.mxu0 %v131
    %167 = vmatprep.subr.mxu0 0.0
    %168 = vmatpush1.msra.mxu0 %v130
    %169 = vmatprep.subr.mxu0 0.0
    %170 = vmatpush1.msra.mxu0 %v129
    %171 = vmatprep.subr.mxu0 0.0
    %172 = vmatpush1.msra.mxu0 %v128
    %173 = vmatprep.subr.mxu0 0.0
    %174 = vmatpush2.msra.mxu0 0.0
    %175 = vmatprep.subr.mxu0 0.0
    %176 = vmatpush2.msra.mxu0 0.0
    %177 = vmatprep.subr.mxu0 0.0
    %178 = vmatpush2.msra.mxu0 0.0
    %179 = vmatprep.subr.mxu0 0.0
    %180 = vmatpush2.msra.mxu0 0.0
    %181 = vmatprep.subr.mxu0 0.0
    %182 = vmatpush2.msra.mxu0 0.0
    %183 = vmatprep.subr.mxu0 0.0
    %184 = vmatpush2.msra.mxu0 0.0
    %185 = vmatprep.subr.mxu0 0.0
    %186 = vmatpush2.msra.mxu0 0.0
    %187 = vmatprep.subr.mxu0 0.0
    %188 = vmatpush2.msra.mxu0 0.0
    %189 = vmatprep.subr.mxu0 0.0
    %190 = vmatpush2.msra.mxu0 0.0
    %191 = vmatprep.subr.mxu0 0.0
    %192 = vmatpush2.msra.mxu0 0.0
    %193 = vmatprep.subr.mxu0 0.0
    %194 = vmatpush2.msra.mxu0 0.0
    %195 = vmatprep.subr.mxu0 0.0
    %196 = vmatpush2.msra.mxu0 0.0
    %197 = vmatprep.subr.mxu0 0.0
    %198 = vmatpush2.msra.mxu0 0.0
    %199 = vmatprep.subr.mxu0 0.0
    %200 = vmatpush2.msra.mxu0 0.0
    %201 = vmatprep.subr.mxu0 0.0
    %202 = vmatpush2.msra.mxu0 0.0
    %203 = vmatprep.subr.mxu0 0.0
    %204 = vmatpush2.msra.mxu0 0.0
    %205 = vmatprep.mubr.f32.mxu0 0.0
    %206 = vmatmul.mubr.f32.gmra.mxu0 %v139
    %v207 = vpop.f32.mrf.mxu0
    %v208 = vadd.f32 %v136, %v207
    %v209 = vpop.f32.mrf.mxu0
    %210 = vdwg.mxu0
    %v211 = vld [vmem:[#allocation2] sm:$0xff]
    %v212 = vld [vmem:[#allocation2 + $0x8] sm:$0xff]
    %v215 = vunpack.c.l.s4 1966171168
    %v216 = vunpack.c.0.s8 %v215
    %v217 = vlaneseq
    %v218 = vshrl.u32 %v217, 7
    %v219 = vsub.s32 %v216, %v218
    %v220 = vrot.slane %v208, %v219
    %v221 = vcombine.high %v220, %v220
    %v223 = vunpack.c.l.s4 1966171168
    %v224 = vunpack.c.0.s8 %v223
    %v225 = vlaneseq
    %v226 = vshrl.u32 %v225, 7
    %v227 = vsub.s32 %v224, %v226
    %v228 = vrot.slane %v220, %v227
    %v230 = vunpack.c.l.s4 1966171168
    %v231 = vunpack.c.0.s8 %v230
    %v232 = vlaneseq
    %v233 = vshrl.u32 %v232, 7
    %v234 = vsub.s32 %v231, %v233
    %v235 = vrot.slane %v221, %v234
    %v236 = vlaneseq
    %v237 = vshrl.u32 %v236, 7
    %v238 = vsub.s32 0, %v237
    %v239 = vrot.slane %v228, %v238
    %v240 = vlaneseq
    %v241 = vshrl.u32 %v240, 7
    %v242 = vsub.s32 0, %v241
    %v243 = vrot.slane %v235, %v242
    %v246 = vadd.f32 %v211, %v239
    %v247 = vadd.f32 %v212, %v243
    %v248 = vtanh.pop %v246
    %v249 = vtanh.pop %v247
    %v250 = vld [vmem:[%s4 + $0x48] sm:$0x1]
    %v251 = vlaneseq
    %v252 = vshrl.u32 %v251, 7
    %v253 = vsub.s32 0, %v252
    %v254 = vrot.slane %v250, %v253
    %v255 = vmul.f32 %v248, %v254
    %v256 = vmul.f32 %v249, %v254
    %v257 = vsel %vm137, %v255, 0.0
    %258 = vadd.xlane.f32.xlu0 %v257
    %v259 = vpop.xlane.xlu0 %258
    %v260 = vsel %vm137, %v256, 0.0
    %261 = vadd.xlane.f32.xlu0 %v260
    %v262 = vpop.xlane.xlu0 %261
    %v265 = vlaneseq
    %v266 = vand.u32 %v265, 127
    %v267 = vlaneseq
    %v268 = vshrl.u32 %v267, 7
    %v269 = vsub.s32 %v266, %v268
    %v270 = vrot.slane %v259, %v269
    %v271 = vlaneseq
    %v272 = vshrl.u32 %v271, 7
    %v273 = vsub.s32 %v266, %v272
    %v274 = vrot.slane %v262, %v273
    %vm275 = vcmask 1041409
    %v276 = vsel %vm275, %v274, %v270
    %vm278 = vcmask 58368
    %v279 = vsel %vm278, %v276, -inf
    %280 = vmax.xlane.f32.xlu0 %v279
    %v281 = vpop.xlane.xlu0 %280
    %v283 = vlaneseq
    %v284 = vshrl.u32 %v283, 7
    %v285 = vsub.s32 0, %v284
    %v286 = vrot.slane %v281, %v285
    %v287 = vlaneseq
    %v288 = vshrl.u32 %v287, 7
    %v289 = vsub.s32 1, %v288
    %v290 = vrot.slane %v281, %v289
    %v293 = vsub.f32 %v259, %v286
    %v294 = vsub.f32 %v262, %v290
    %v295 = vmul.f32 %v293, 1.442695
    %v296 = vpow.pop %v295
    %v297 = vmul.f32 %v294, 1.442695
    %v298 = vpow.pop %v297
    %301 = vset.pattern.permute.xlu0 0
    %302 = vperm.xlu0 %301, %v296
    %v303 = vpop.permute.xlu0 %302
    %304 = vset.pattern.permute.xlu0 0
    %305 = vperm.xlu0 %304, %v298
    %v306 = vpop.permute.xlu0 %305
    %v307 = vlaneseq
    %v308 = vshrl.u32 %v307, 7
    %v309 = vsub.s32 %v266, %v308
    %v310 = vrot.slane %v303, %v309
    %v311 = vlaneseq
    %v312 = vshrl.u32 %v311, 7
    %v313 = vsub.s32 %v266, %v312
    %v314 = vrot.slane %v306, %v313
    %v315 = vsel %vm275, %v314, %v310
    %v317 = vsel %vm278, %v315, 0.0
    %318 = vadd.xlane.f32.xlu0 %v317
    %v319 = vpop.xlane.xlu0 %318
    %v321 = vlaneseq
    %v322 = vshrl.u32 %v321, 7
    %v323 = vsub.s32 0, %v322
    %v324 = vrot.slane %v319, %v323
    %v325 = vlaneseq
    %v326 = vshrl.u32 %v325, 7
    %v327 = vsub.s32 1, %v326
    %v328 = vrot.slane %v319, %v327
    %v331 = vrcp.pop %v324
    %v332 = vmul.f32 %v296, %v331
    %v333 = vrcp.pop %v328
    %v334 = vmul.f32 %v298, %v333
    %336 = vset.pattern.permute.xlu0 0
    %337 = vperm.xlu0 %336, %v332
    %v338 = vpop.permute.xlu0 %337
    %341 = vset.pattern.permute.xlu0 0
    %342 = vperm.xlu0 %341, %v334
    %v343 = vpop.permute.xlu0 %342
    %v345 = vmul.f32 %v338, %v125
    %v346 = vmul.f32 %v343, %v126
    %v347 = vsel %vm137, %v345, 0.0
    %v348 = vrot.slane %v347, 4
    %v349 = vadd.f32 %v347, %v348
    %v350 = vrot.slane %v349, 2
    %v351 = vadd.f32 %v349, %v350
    %v352 = vrot.slane %v351, 1
    %v353 = vadd.f32 %v351, %v352
    %v354 = vsel %vm137, %v346, 0.0
    %v355 = vrot.slane %v354, 4
    %v356 = vadd.f32 %v354, %v355
    %v357 = vrot.slane %v356, 2
    %v358 = vadd.f32 %v356, %v357
    %v359 = vrot.slane %v358, 1
    %v360 = vadd.f32 %v358, %v359
    %v361 = vld [vmem:[%s5] sm:$0xff]
    %v362 = vld [vmem:[%s5 + $0x8] sm:$0xff]
    %v363 = vld [vmem:[%s5 + $0x10] sm:$0xff]
    %v364 = vld [vmem:[%s5 + $0x18] sm:$0xff]
    %v365 = vld [vmem:[%s5 + $0x20] sm:$0xff]
    %v366 = vld [vmem:[%s5 + $0x28] sm:$0xff]
    %vm367 = vcmask 130048
    %v369 = vsel %vm367, %v127, 0
    %371 = vmatprep.subr.mxu0 0.0
    %372 = vmatpush1.msra.mxu0 0.0
    %373 = vmatprep.subr.mxu0 0.0
    %374 = vmatpush1.msra.mxu0 0.0
    %375 = vmatprep.subr.mxu0 0.0
    %376 = vmatpush1.msra.mxu0 0.0
    %377 = vmatprep.subr.mxu0 0.0
    %378 = vmatpush1.msra.mxu0 0.0
    %379 = vmatprep.subr.mxu0 0.0
    %380 = vmatpush1.msra.mxu0 0.0
    %381 = vmatprep.subr.mxu0 0.0
    %382 = vmatpush1.msra.mxu0 0.0
    %383 = vmatprep.subr.mxu0 0.0
    %384 = vmatpush1.msra.mxu0 0.0
    %385 = vmatprep.subr.mxu0 0.0
    %386 = vmatpush1.msra.mxu0 0.0
    %387 = vmatprep.subr.mxu0 0.0
    %388 = vmatpush1.msra.mxu0 0.0
    %389 = vmatprep.subr.mxu0 0.0
    %390 = vmatpush1.msra.mxu0 0.0
    %391 = vmatprep.subr.mxu0 0.0
    %392 = vmatpush1.msra.mxu0 0.0
    %393 = vmatprep.subr.mxu0 0.0
    %394 = vmatpush1.msra.mxu0 0.0
    %395 = vmatprep.subr.mxu0 0.0
    %396 = vmatpush1.msra.mxu0 0.0
    %397 = vmatprep.subr.mxu0 0.0
    %398 = vmatpush1.msra.mxu0 0.0
    %399 = vmatprep.subr.mxu0 0.0
    %400 = vmatpush1.msra.mxu0 %v366
    %401 = vmatprep.subr.mxu0 0.0
    %402 = vmatpush1.msra.mxu0 %v365
    %403 = vmatprep.subr.mxu0 0.0
    %404 = vmatpush2.msra.mxu0 0.0
    %405 = vmatprep.subr.mxu0 0.0
    %406 = vmatpush2.msra.mxu0 0.0
    %407 = vmatprep.subr.mxu0 0.0
    %408 = vmatpush2.msra.mxu0 0.0
    %409 = vmatprep.subr.mxu0 0.0
    %410 = vmatpush2.msra.mxu0 0.0
    %411 = vmatprep.subr.mxu0 0.0
    %412 = vmatpush2.msra.mxu0 0.0
    %413 = vmatprep.subr.mxu0 0.0
    %414 = vmatpush2.msra.mxu0 0.0
    %415 = vmatprep.subr.mxu0 0.0
    %416 = vmatpush2.msra.mxu0 0.0
    %417 = vmatprep.subr.mxu0 0.0
    %418 = vmatpush2.msra.mxu0 0.0
    %419 = vmatprep.subr.mxu0 0.0
    %420 = vmatpush2.msra.mxu0 0.0
    %421 = vmatprep.subr.mxu0 0.0
    %422 = vmatpush2.msra.mxu0 0.0
    %423 = vmatprep.subr.mxu0 0.0
    %424 = vmatpush2.msra.mxu0 0.0
    %425 = vmatprep.subr.mxu0 0.0
    %426 = vmatpush2.msra.mxu0 0.0
    %427 = vmatprep.subr.mxu0 0.0
    %428 = vmatpush2.msra.mxu0 0.0
    %429 = vmatprep.subr.mxu0 0.0
    %430 = vmatpush2.msra.mxu0 0.0
    %431 = vmatprep.subr.mxu0 0.0
    %432 = vmatpush2.msra.mxu0 0.0
    %433 = vmatprep.subr.mxu0 0.0
    %434 = vmatpush2.msra.mxu0 0.0
    %435 = vmatprep.mubr.f32.mxu0 0.0
    %436 = vmatmul.mubr.f32.gmra.mxu0 %v369
    %v437 = vpop.f32.mrf.mxu0
    %v438 = vadd.f32 0.0, %v437
    %v439 = vpop.f32.mrf.mxu0
    %440 = vdwg.mxu0
    %v443 = vsel %vm275, %v360, %v353
    %v444 = vsel %vm137, %v443, 0
    %446 = vmatprep.subr.mxu0 0.0
    %447 = vmatpush1.msra.mxu0 0.0
    %448 = vmatprep.subr.mxu0 0.0
    %449 = vmatpush1.msra.mxu0 0.0
    %450 = vmatprep.subr.mxu0 0.0
    %451 = vmatpush1.msra.mxu0 0.0
    %452 = vmatprep.subr.mxu0 0.0
    %453 = vmatpush1.msra.mxu0 0.0
    %454 = vmatprep.subr.mxu0 0.0
    %455 = vmatpush1.msra.mxu0 0.0
    %456 = vmatprep.subr.mxu0 0.0
    %457 = vmatpush1.msra.mxu0 0.0
    %458 = vmatprep.subr.mxu0 0.0
    %459 = vmatpush1.msra.mxu0 0.0
    %460 = vmatprep.subr.mxu0 0.0
    %461 = vmatpush1.msra.mxu0 0.0
    %462 = vmatprep.subr.mxu0 0.0
    %463 = vmatpush1.msra.mxu0 0.0
    %464 = vmatprep.subr.mxu0 0.0
    %465 = vmatpush1.msra.mxu0 0.0
    %466 = vmatprep.subr.mxu0 0.0
    %467 = vmatpush1.msra.mxu0 0.0
    %468 = vmatprep.subr.mxu0 0.0
    %469 = vmatpush1.msra.mxu0 0.0
    %470 = vmatprep.subr.mxu0 0.0
    %471 = vmatpush1.msra.mxu0 %v364
    %472 = vmatprep.subr.mxu0 0.0
    %473 = vmatpush1.msra.mxu0 %v363
    %474 = vmatprep.subr.mxu0 0.0
    %475 = vmatpush1.msra.mxu0 %v362
    %476 = vmatprep.subr.mxu0 0.0
    %477 = vmatpush1.msra.mxu0 %v361
    %478 = vmatprep.subr.mxu0 0.0
    %479 = vmatpush2.msra.mxu0 0.0
    %480 = vmatprep.subr.mxu0 0.0
    %481 = vmatpush2.msra.mxu0 0.0
    %482 = vmatprep.subr.mxu0 0.0
    %483 = vmatpush2.msra.mxu0 0.0
    %484 = vmatprep.subr.mxu0 0.0
    %485 = vmatpush2.msra.mxu0 0.0
    %486 = vmatprep.subr.mxu0 0.0
    %487 = vmatpush2.msra.mxu0 0.0
    %488 = vmatprep.subr.mxu0 0.0
    %489 = vmatpush2.msra.mxu0 0.0
    %490 = vmatprep.subr.mxu0 0.0
    %491 = vmatpush2.msra.mxu0 0.0
    %492 = vmatprep.subr.mxu0 0.0
    %493 = vmatpush2.msra.mxu0 0.0
    %494 = vmatprep.subr.mxu0 0.0
    %495 = vmatpush2.msra.mxu0 0.0
    %496 = vmatprep.subr.mxu0 0.0
    %497 = vmatpush2.msra.mxu0 0.0
    %498 = vmatprep.subr.mxu0 0.0
    %499 = vmatpush2.msra.mxu0 0.0
    %500 = vmatprep.subr.mxu0 0.0
    %501 = vmatpush2.msra.mxu0 0.0
    %502 = vmatprep.subr.mxu0 0.0
    %503 = vmatpush2.msra.mxu0 0.0
    %504 = vmatprep.subr.mxu0 0.0
    %505 = vmatpush2.msra.mxu0 0.0
    %506 = vmatprep.subr.mxu0 0.0
    %507 = vmatpush2.msra.mxu0 0.0
    %508 = vmatprep.subr.mxu0 0.0
    %509 = vmatpush2.msra.mxu0 0.0
    %510 = vmatprep.mubr.f32.mxu0 0.0
    %511 = vmatmul.mubr.f32.gmra.mxu0 %v444
    %v512 = vpop.f32.mrf.mxu0
    %v513 = vadd.f32 %v438, %v512
    %v514 = vpop.f32.mrf.mxu0
    %515 = vdwg.mxu0
    %v516 = vld [vmem:[%s5 + $0x30] sm:$0xff]
    %v517 = vld [vmem:[%s5 + $0x38] sm:$0xff]
    %v518 = vld [vmem:[%s5 + $0x40] sm:$0xff]
    %v519 = vld [vmem:[%s5 + $0x48] sm:$0xff]
    %520 = vmatprep.subr.mxu0 0.0
    %521 = vmatpush1.msra.mxu0 0.0
    %522 = vmatprep.subr.mxu0 0.0
    %523 = vmatpush1.msra.mxu0 0.0
    %524 = vmatprep.subr.mxu0 0.0
    %525 = vmatpush1.msra.mxu0 0.0
    %526 = vmatprep.subr.mxu0 0.0
    %527 = vmatpush1.msra.mxu0 0.0
    %528 = vmatprep.subr.mxu0 0.0
    %529 = vmatpush1.msra.mxu0 0.0
    %530 = vmatprep.subr.mxu0 0.0
    %531 = vmatpush1.msra.mxu0 0.0
    %532 = vmatprep.subr.mxu0 0.0
    %533 = vmatpush1.msra.mxu0 0.0
    %534 = vmatprep.subr.mxu0 0.0
    %535 = vmatpush1.msra.mxu0 0.0
    %536 = vmatprep.subr.mxu0 0.0
    %537 = vmatpush1.msra.mxu0 0.0
    %538 = vmatprep.subr.mxu0 0.0
    %539 = vmatpush1.msra.mxu0 0.0
    %540 = vmatprep.subr.mxu0 0.0
    %541 = vmatpush1.msra.mxu0 0.0
    %542 = vmatprep.subr.mxu0 0.0
    %543 = vmatpush1.msra.mxu0 0.0
    %544 = vmatprep.subr.mxu0 0.0
    %545 = vmatpush1.msra.mxu0 %v519
    %546 = vmatprep.subr.mxu0 0.0
    %547 = vmatpush1.msra.mxu0 %v518
    %548 = vmatprep.subr.mxu0 0.0
    %549 = vmatpush1.msra.mxu0 %v517
    %550 = vmatprep.subr.mxu0 0.0
    %551 = vmatpush1.msra.mxu0 %v516
    %552 = vmatprep.subr.mxu0 0.0
    %553 = vmatpush2.msra.mxu0 0.0
    %554 = vmatprep.subr.mxu0 0.0
    %555 = vmatpush2.msra.mxu0 0.0
    %556 = vmatprep.subr.mxu0 0.0
    %557 = vmatpush2.msra.mxu0 0.0
    %558 = vmatprep.subr.mxu0 0.0
    %559 = vmatpush2.msra.mxu0 0.0
    %560 = vmatprep.subr.mxu0 0.0
    %561 = vmatpush2.msra.mxu0 0.0
    %562 = vmatprep.subr.mxu0 0.0
    %563 = vmatpush2.msra.mxu0 0.0
    %564 = vmatprep.subr.mxu0 0.0
    %565 = vmatpush2.msra.mxu0 0.0
    %566 = vmatprep.subr.mxu0 0.0
    %567 = vmatpush2.msra.mxu0 0.0
    %568 = vmatprep.subr.mxu0 0.0
    %569 = vmatpush2.msra.mxu0 0.0
    %570 = vmatprep.subr.mxu0 0.0
    %571 = vmatpush2.msra.mxu0 0.0
    %572 = vmatprep.subr.mxu0 0.0
    %573 = vmatpush2.msra.mxu0 0.0
    %574 = vmatprep.subr.mxu0 0.0
    %575 = vmatpush2.msra.mxu0 0.0
    %576 = vmatprep.subr.mxu0 0.0
    %577 = vmatpush2.msra.mxu0 0.0
    %578 = vmatprep.subr.mxu0 0.0
    %579 = vmatpush2.msra.mxu0 0.0
    %580 = vmatprep.subr.mxu0 0.0
    %581 = vmatpush2.msra.mxu0 0.0
    %582 = vmatprep.subr.mxu0 0.0
    %583 = vmatpush2.msra.mxu0 0.0
    %584 = vmatprep.mubr.f32.mxu0 0.0
    %585 = vmatmul.mubr.f32.gmra.mxu0 %v139
    %v586 = vpop.f32.mrf.mxu0
    %v587 = vadd.f32 0.0, %v586
    %v588 = vpop.f32.mrf.mxu0
    %589 = vdwg.mxu0
    %v590 = vadd.f32 %v513, %v587
    %v591 = vld [vmem:[%s5 + $0x50] sm:$0x1]
    %v592 = vlaneseq
    %v593 = vshrl.u32 %v592, 7
    %v594 = vsub.s32 0, %v593
    %v595 = vrot.slane %v591, %v594
    %v596 = vadd.f32 %v590, %v595
    %v597 = vxor.u32 %v596, 2147483648
    %v598 = vmul.f32 %v597, 1.442695
    %v599 = vpow.pop %v598
    %v600 = vadd.f32 %v599, 1.0
    %v601 = vrcp.pop %v600
    %v602 = vmul.f32 1.0, %v601
    %v603 = vtanh.pop %v596
    %605 = vrot.lane.b32.xlu0 %v124, 32
    %v606 = vpop.permute.xlu0 %605
    %v608 = vmul.f32 %v602, %v606
    %610 = vrot.lane.b32.xlu0 %v603, 32
    %v611 = vpop.permute.xlu0 %610
    %v613 = vmul.f32 %v602, %v611
    %615 = vrot.lane.b32.xlu0 %v613, 32
    %v616 = vpop.permute.xlu0 %615
    %v618 = vadd.f32 %v608, %v616
    %v619 = vtanh.pop %v618
    %621 = vrot.lane.b32.xlu0 %v619, 32
    %v622 = vpop.permute.xlu0 %621
    %v624 = vmul.f32 %v602, %v622
    %626 = vrot.lane.b32.xlu0 %v624, 64
    %v627 = vpop.permute.xlu0 %626
    %vm629 = vcmask 254976
    %630 = vst.msk [vmem:[#allocation3] sm:$0x3] %vm629, %v627
    %632 = vrot.lane.b32.xlu0 %v618, 96
    %v633 = vpop.permute.xlu0 %632
    %635 = vst.msk [vmem:[#allocation4] sm:$0x3] %vm629, %v633
    %636 = vst.msk [vmem:[#allocation5] sm:$0x3] %vm629, %v627
    %vm637 = vcmask 517376
    %638 = vst.msk [vmem:[#allocation5] sm:$0x3] %vm637, %v618
    %639 = vrot.lane.b32.xlu0 %v443, 64
    %v640 = vpop.permute.xlu0 %639
    %vm642 = vcmask 779776
    %643 = vst.msk [vmem:[#allocation5] sm:$0x3] %vm642, %v640
    %v644 = vadd.s32 %v266, 4294967200
    %v645 = vlaneseq
    %v646 = vshrl.u32 %v645, 7
    %v647 = vsub.s32 %v644, %v646
    %v648 = vrot.slane %v338, %v647
    %v649 = vlaneseq
    %v650 = vshrl.u32 %v649, 7
    %v651 = vsub.s32 %v644, %v650
    %v652 = vrot.slane %v343, %v651
    %v653 = vsel %vm275, %v652, %v648
    %vm655 = vcmask 845568
    %656 = vst.msk [vmem:[#allocation5] sm:$0x3] %vm655, %v653
    %vm657 = vcmask 1042240
    %658 = vst.msk [vmem:[#allocation5] sm:$0x3] %vm657, 0.0
    // Predicated region
    $region30: #{tpu_custom_call.1} parent=1 // pred_check
      _
    $region31: #{tpu_custom_call.1} parent=1 // pred_check_branch
      %660 = sbr.rel (0) target = $region33
    $region32: #{tpu_custom_call.1} parent=1 // pred_region
      %s662 = ssub.s32 32, 32
      %663 = vsyncadd [#allocation6], %s662
      %s665 = sshll.u32 [#allocation5], 4
      %s666 = int_to_ptr.vmem [resolvable:$true] %s665
      %668 = dma.vmem_to_hbm [thread:$0]  %s666, 32, %s6, [#allocation6]
    $region33: #{tpu_custom_call.1} parent=1 // pred_fallthru
      _
    // Predicated region
    $region34: #{tpu_custom_call.1} parent=1 // pred_check
      _
    $region35: #{tpu_custom_call.1} parent=1 // pred_check_branch
      %670 = sbr.rel (0) target = $region37
    $region36: #{tpu_custom_call.1} parent=1 // pred_region
      %671 = dma.done [#allocation6], 32
    $region37: #{tpu_custom_call.1} parent=1 // pred_fallthru
      _
    %672 = vsyncpa [#allocation6], 1

</llo_original>
